<compile_context>
chip_gen: v5e
topology: v5e:2x2
jax: 0.10.0
libtpu: 0.0.40
codegen_flags: <defaults>
</compile_context>

<pallas_src>
import jax
import jax.numpy as jnp
from jax.experimental import pallas as pl
from jax.experimental.pallas import tpu as pltpu


def seq_last_selector_kernel(x_ref, w1_ref, b1_ref, w2_ref, b2_ref, o_ref):
    # x_ref: [TB, D] — last-timestep rows; mask + BatchNorm already folded into
    # w1_eff / b1_eff, so the kernel is just the 2-layer MLP on the MXU.
    x = x_ref[...]
    h = jnp.dot(x, w1_ref[...], preferred_element_type=jnp.float32) + b1_ref[...]
    h = jnp.maximum(h, 0.0)
    out = jnp.dot(h, w2_ref[...], preferred_element_type=jnp.float32) + b2_ref[...]
    o_ref[...] = out.astype(o_ref.dtype)


def prepare_params(mask, running_mean, running_var, w1, b1, eps=1e-5):
    """One-time fold of omit-mask + eval BatchNorm into the first Linear.

    Called once at parameter-setup time (NOT per forward call).
      (x*mask - mean) * inv_std @ w1 + b1
        == x @ (mask*inv_std)[:,None]*w1  +  (b1 - (mean*inv_std) @ w1)
    """
    inv_std = jax.lax.rsqrt(running_var + jnp.float32(eps))     # [1, D]
    scale = mask * inv_std                                      # [1, D]
    w1_eff = scale.reshape(-1, 1) * w1                          # [D, H]
    b1_eff = b1 - (running_mean * inv_std) @ w1                 # [1, H]
    return w1_eff, b1_eff


@jax.jit
def seq_last_selector_forward(x, w1_eff, b1_eff, w2, b2):
    B, T, D = x.shape
    H = w1_eff.shape[1]
    O = w2.shape[1]

    # Last-timestep selection in the wrapper: the kernel only sees [B, D].
    x_last = x[:, T - 1, :]

    # Batch tiling: full batch in one tile when small, 128-row tiles otherwise.
    TB = B if B <= 128 else 128
    grid = (pl.cdiv(B, TB),)

    vmem = pltpu.MemorySpace.VMEM
    out = pl.pallas_call(
        seq_last_selector_kernel,
        out_shape=jax.ShapeDtypeStruct((B, O), jnp.float32),
        grid_spec=pltpu.PrefetchScalarGridSpec(
            num_scalar_prefetch=0,
            grid=grid,
            in_specs=[
                pl.BlockSpec((TB, D), lambda i: (i, 0), memory_space=vmem),  # x_last
                pl.BlockSpec((D, H), lambda i: (0, 0), memory_space=vmem),   # w1_eff
                pl.BlockSpec((1, H), lambda i: (0, 0), memory_space=vmem),   # b1_eff
                pl.BlockSpec((H, O), lambda i: (0, 0), memory_space=vmem),   # w2
                pl.BlockSpec((1, O), lambda i: (0, 0), memory_space=vmem),   # b2
            ],
            out_specs=pl.BlockSpec((TB, O), lambda i: (i, 0), memory_space=vmem),
        ),
        compiler_params=pltpu.CompilerParams(
            dimension_semantics=("parallel",)),
    )(x_last, w1_eff, b1_eff, w2, b2)

    # The PyTorch forward returns (inner_module(processed_x), (None, None))
    return out, (None, None)


def _reference(x, mask, running_mean, running_var, w1, b1, w2, b2):
    xt = x[:, -1, :] * mask
    xt = (xt - running_mean) / jnp.sqrt(running_var + 1e-5)
    h = jnp.maximum(xt @ w1 + b1, 0.0)
    return h @ w2 + b2


if __name__ == "__main__":
    key = jax.random.PRNGKey(0)
    B, T, D, H, O = 2, 8, 16, 32, 8       # batch, seq len, input_dim, hidden, output

    k_x, k_m, k_v, k_w1, k_b1, k_w2, k_b2 = jax.random.split(key, 7)

    # Stacked list of sequences: [B, T, D]
    x = jax.random.normal(k_x, (B, T, D), dtype=jnp.float32)

    # omit_obs_idxs = [1, 3]  -> multiplicative zero-mask over feature columns
    omit_obs_idxs = jnp.array([1, 3], dtype=jnp.int32)
    mask = jnp.ones((1, D), dtype=jnp.float32).at[0, omit_obs_idxs].set(0.0)

    # BatchNorm1d running statistics (eval mode, affine=False)
    running_mean = 0.1 * jax.random.normal(k_m, (1, D), dtype=jnp.float32)
    running_var = jnp.abs(jax.random.normal(k_v, (1, D), dtype=jnp.float32)) + 0.5

    # inner_module parameters (deterministic init)
    w1 = 0.1 * jax.random.normal(k_w1, (D, H), dtype=jnp.float32)
    b1 = 0.1 * jax.random.normal(k_b1, (1, H), dtype=jnp.float32)
    w2 = 0.1 * jax.random.normal(k_w2, (H, O), dtype=jnp.float32)
    b2 = 0.1 * jax.random.normal(k_b2, (1, O), dtype=jnp.float32)

    # One-time parameter fold (outside the per-call path).
    w1_eff, b1_eff = prepare_params(mask, running_mean, running_var, w1, b1)
    w1_eff = jax.block_until_ready(w1_eff)
    b1_eff = jax.block_until_ready(b1_eff)

    (out, aux) = seq_last_selector_forward(x, w1_eff, b1_eff, w2, b2)
    out = jax.block_until_ready(out)

    ref = _reference(x, mask, running_mean, running_var, w1, b1, w2, b2)
    assert out.shape == (B, O)
    assert aux == (None, None)
    assert jnp.allclose(out, ref, atol=1e-5, rtol=1e-5), "mismatch vs reference"

    print("KERNEL_OK")
</pallas_src>

<mosaic_0001>
module attributes {stable_mosaic.version = 11 : i64} {
  func.func @seq_last_selector_kernel(%arg0: i32, %arg1: memref<2x16xf32, #tpu.memory_space<vmem>>, %arg2: memref<16x32xf32, #tpu.memory_space<vmem>>, %arg3: memref<1x32xf32, #tpu.memory_space<vmem>>, %arg4: memref<32x8xf32, #tpu.memory_space<vmem>>, %arg5: memref<1x8xf32, #tpu.memory_space<vmem>>, %arg6: memref<2x8xf32, #tpu.memory_space<vmem>>) attributes {dimension_semantics = [#tpu.dimension_semantics<parallel>], iteration_bounds = array<i64: 1>, scalar_prefetch = 0 : i64, scratch_operands = 0 : i64, tpu.core_type = #tpu.core_type<tc>, window_params = [{transform_indices = @transform_0, window_bounds = array<i64: 2, 16>}, {pipeline_mode = #tpu.pipeline_mode<synchronous>, transform_indices = @transform_1, window_bounds = array<i64: 16, 32>}, {pipeline_mode = #tpu.pipeline_mode<synchronous>, transform_indices = @transform_2, window_bounds = array<i64: 1, 32>}, {pipeline_mode = #tpu.pipeline_mode<synchronous>, transform_indices = @transform_3, window_bounds = array<i64: 32, 8>}, {pipeline_mode = #tpu.pipeline_mode<synchronous>, transform_indices = @transform_4, window_bounds = array<i64: 1, 8>}, {transform_indices = @transform_5, window_bounds = array<i64: 2, 8>}]} {
    %c0 = arith.constant 0 : index
    %c0_0 = arith.constant 0 : index
    %0 = vector.load %arg1[%c0, %c0_0] : memref<2x16xf32, #tpu.memory_space<vmem>>, vector<2x16xf32>
    %c0_1 = arith.constant 0 : index
    %c0_2 = arith.constant 0 : index
    %1 = vector.load %arg2[%c0_1, %c0_2] : memref<16x32xf32, #tpu.memory_space<vmem>>, vector<16x32xf32>
    %cst = arith.constant dense<0.000000e+00> : vector<2x32xf32>
    %2 = tpu.matmul %0, %1, %cst {dimension_numbers = #tpu.dot_dimension_numbers<[1], [0], [0], [1], [0, 0, 1, 1], [], []>} : vector<2x16xf32>, vector<16x32xf32>, vector<2x32xf32> -> vector<2x32xf32>
    %c0_3 = arith.constant 0 : index
    %c0_4 = arith.constant 0 : index
    %3 = vector.load %arg3[%c0_3, %c0_4] : memref<1x32xf32, #tpu.memory_space<vmem>>, vector<1x32xf32>
    %4 = vector.broadcast %3 : vector<1x32xf32> to vector<2x32xf32>
    %5 = arith.addf %2, %4 : vector<2x32xf32>
    %cst_5 = arith.constant 0.000000e+00 : f32
    %6 = vector.broadcast %cst_5 : f32 to vector<2x32xf32>
    %7 = arith.maximumf %5, %6 : vector<2x32xf32>
    %c0_6 = arith.constant 0 : index
    %c0_7 = arith.constant 0 : index
    %8 = vector.load %arg4[%c0_6, %c0_7] : memref<32x8xf32, #tpu.memory_space<vmem>>, vector<32x8xf32>
    %cst_8 = arith.constant dense<0.000000e+00> : vector<2x8xf32>
    %9 = tpu.matmul %7, %8, %cst_8 {dimension_numbers = #tpu.dot_dimension_numbers<[1], [0], [0], [1], [0, 0, 1, 1], [], []>} : vector<2x32xf32>, vector<32x8xf32>, vector<2x8xf32> -> vector<2x8xf32>
    %c0_9 = arith.constant 0 : index
    %c0_10 = arith.constant 0 : index
    %10 = vector.load %arg5[%c0_9, %c0_10] : memref<1x8xf32, #tpu.memory_space<vmem>>, vector<1x8xf32>
    %11 = vector.broadcast %10 : vector<1x8xf32> to vector<2x8xf32>
    %12 = arith.addf %9, %11 : vector<2x8xf32>
    %c0_11 = arith.constant 0 : index
    %c0_12 = arith.constant 0 : index
    %13 = vector.load %arg6[%c0_11, %c0_12] : memref<2x8xf32, #tpu.memory_space<vmem>>, vector<2x8xf32>
    tpu.vector_store %arg6[%c0_11, %c0_12], %12 {strides = array<i32>} : memref<2x8xf32, #tpu.memory_space<vmem>>, vector<2x8xf32>,
    return
  }
  func.func @transform_0(%arg0: i32) -> (i32, i32) {
    %c0_i32 = arith.constant 0 : i32
    %c0_i32_0 = arith.constant 0 : i32
    return %arg0, %c0_i32 : i32, i32
  }
  func.func @transform_1(%arg0: i32) -> (i32, i32) {
    %c0_i32 = arith.constant 0 : i32
    %c0_i32_0 = arith.constant 0 : i32
    %c0_i32_1 = arith.constant 0 : i32
    return %c0_i32, %c0_i32_0 : i32, i32
  }
  func.func @transform_2(%arg0: i32) -> (i32, i32) {
    %c0_i32 = arith.constant 0 : i32
    %c0_i32_0 = arith.constant 0 : i32
    %c0_i32_1 = arith.constant 0 : i32
    return %c0_i32, %c0_i32_0 : i32, i32
  }
  func.func @transform_3(%arg0: i32) -> (i32, i32) {
    %c0_i32 = arith.constant 0 : i32
    %c0_i32_0 = arith.constant 0 : i32
    %c0_i32_1 = arith.constant 0 : i32
    return %c0_i32, %c0_i32_0 : i32, i32
  }
  func.func @transform_4(%arg0: i32) -> (i32, i32) {
    %c0_i32 = arith.constant 0 : i32
    %c0_i32_0 = arith.constant 0 : i32
    %c0_i32_1 = arith.constant 0 : i32
    return %c0_i32, %c0_i32_0 : i32, i32
  }
  func.func @transform_5(%arg0: i32) -> (i32, i32) {
    %c0_i32 = arith.constant 0 : i32
    %c0_i32_0 = arith.constant 0 : i32
    return %arg0, %c0_i32 : i32, i32
  }
}

</mosaic_0001>

<llo_original>
// kernel: seq_last_selector_forward.1
$region0: #{seq_last_selector_forward.1}
  #allocation0 [shape = 'u32[]', space=smem, size = 0x4, offset = 0x4, fixed_abs, tag = 'smem constant byte address 0x4 - core index']
  #allocation1 [shape = 'u32[72,128]{1,0:T(1,128)}', space=vmem, size = 0x9000, scoped, tag = 'internal scratch']
  %s0 = inlined_call_operand.vmem [shape: f32[2,16], index: 0, kind: input, shape index: {}]
  %s1 = inlined_call_operand.vmem [shape: f32[16,32], index: 1, kind: input, shape index: {}]
  %s2 = inlined_call_operand.vmem [shape: f32[1,32], index: 2, kind: input, shape index: {}]
  %s3 = inlined_call_operand.vmem [shape: f32[32,8], index: 3, kind: input, shape index: {}]
  %s4 = inlined_call_operand.vmem [shape: f32[1,8], index: 4, kind: input, shape index: {}]
  %s5 = inlined_call_operand.hbm [shape: f32[2,8], index: 5, kind: output, shape index: {}]
  %s6 = sld [smem:[#allocation0]]
  $region30: #{seq_last_selector_forward.1} parent=0
    _
  %s8 = ssub.s32 1, %s6
  %s9 = scalar_select 0, %s8, %s6
  $region1: #{seq_last_selector_forward.1} parent=0
    #allocation2 [shape = 'u8[1024]{0}', space=vmem, size = 0x400, scoped, tag = 'output window, operand 0, single buffered']
    #allocation3 [shape = 's32[1]{0}', space=sflag, size = 0x4, scoped, tag = 'scoped memory for seq_last_selector_forward.1']
    %10 = vsyncpa [#allocation3], 0
    // Predicated region
    $region2: #{seq_last_selector_forward.1} parent=1 // pred_check
      _
    $region3: #{seq_last_selector_forward.1} parent=1 // pred_check_branch
      %12 = sbr.rel (0) target = $region5
    $region4: #{seq_last_selector_forward.1} parent=1 // pred_region
      _
    $region5: #{seq_last_selector_forward.1} parent=1 // pred_fallthru
      _
    // Predicated region
    $region6: #{seq_last_selector_forward.1} parent=1 // pred_check
      _
    $region7: #{seq_last_selector_forward.1} parent=1 // pred_check_branch
      %14 = sbr.rel (0) target = $region9
    $region8: #{seq_last_selector_forward.1} parent=1 // pred_region
      _
    $region9: #{seq_last_selector_forward.1} parent=1 // pred_fallthru
      _
    // Predicated region
    $region10: #{seq_last_selector_forward.1} parent=1 // pred_check
      _
    $region11: #{seq_last_selector_forward.1} parent=1 // pred_check_branch
      %16 = sbr.rel (0) target = $region13
    $region12: #{seq_last_selector_forward.1} parent=1 // pred_region
      _
    $region13: #{seq_last_selector_forward.1} parent=1 // pred_fallthru
      _
    // Predicated region
    $region14: #{seq_last_selector_forward.1} parent=1 // pred_check
      _
    $region15: #{seq_last_selector_forward.1} parent=1 // pred_check_branch
      %18 = sbr.rel (0) target = $region17
    $region16: #{seq_last_selector_forward.1} parent=1 // pred_region
      _
    $region17: #{seq_last_selector_forward.1} parent=1 // pred_fallthru
      _
    // Predicated region
    $region18: #{seq_last_selector_forward.1} parent=1 // pred_check
      _
    $region19: #{seq_last_selector_forward.1} parent=1 // pred_check_branch
      %20 = sbr.rel (0) target = $region21
    $region20: #{seq_last_selector_forward.1} parent=1 // pred_region
      _
    $region21: #{seq_last_selector_forward.1} parent=1 // pred_fallthru
      _
    %v21 = vld [vmem:[%s0] sm:$0x3]
    %v22 = vld [vmem:[%s1] sm:$0xff]
    %v23 = vld [vmem:[%s1 + $0x8] sm:$0xff]
    %v24 = vld [vmem:[%s2] sm:$0x1]
    %v26 = vperm.slane %v24, 0
    %vm28 = vcmask 130048
    %v30 = vsel %vm28, %v21, 0
    %32 = vmatpush.msra.mxu0 0.0
    %33 = vmatpush.msra.mxu0 0.0
    %34 = vmatpush.msra.mxu0 0.0
    %35 = vmatpush.msra.mxu0 0.0
    %36 = vmatpush.msra.mxu0 0.0
    %37 = vmatpush.msra.mxu0 0.0
    %38 = vmatpush.msra.mxu0 0.0
    %39 = vmatpush.msra.mxu0 0.0
    %40 = vmatpush.msra.mxu0 0.0
    %41 = vmatpush.msra.mxu0 0.0
    %42 = vmatpush.msra.mxu0 0.0
    %43 = vmatpush.msra.mxu0 0.0
    %44 = vmatpush.msra.mxu0 0.0
    %45 = vmatpush.msra.mxu0 0.0
    %46 = vmatpush.msra.mxu0 %v23
    %47 = vmatpush.msra.mxu0 %v22
    %48 = vmatmul.f32.gmra.mxu0 %v30
    %v49 = vpop.f32.mrf.mxu0
    %v50 = vadd.f32 %v26, %v49
    %51 = vdwg.mxu0
    %v52 = vmax.f32 %v50, 0.0
    %v53 = vld [vmem:[%s3] sm:$0xff]
    %v54 = vld [vmem:[%s3 + $0x8] sm:$0xff]
    %v55 = vld [vmem:[%s3 + $0x10] sm:$0xff]
    %v56 = vld [vmem:[%s3 + $0x18] sm:$0xff]
    %v57 = vld [vmem:[%s4] sm:$0x1]
    %v59 = vperm.slane %v57, 0
    %vm61 = vcmask 261120
    %v63 = vsel %vm61, %v52, 0
    %65 = vmatpush.msra.mxu0 0.0
    %66 = vmatpush.msra.mxu0 0.0
    %67 = vmatpush.msra.mxu0 0.0
    %68 = vmatpush.msra.mxu0 0.0
    %69 = vmatpush.msra.mxu0 0.0
    %70 = vmatpush.msra.mxu0 0.0
    %71 = vmatpush.msra.mxu0 0.0
    %72 = vmatpush.msra.mxu0 0.0
    %73 = vmatpush.msra.mxu0 0.0
    %74 = vmatpush.msra.mxu0 0.0
    %75 = vmatpush.msra.mxu0 0.0
    %76 = vmatpush.msra.mxu0 0.0
    %77 = vmatpush.msra.mxu0 %v56
    %78 = vmatpush.msra.mxu0 %v55
    %79 = vmatpush.msra.mxu0 %v54
    %80 = vmatpush.msra.mxu0 %v53
    %81 = vmatmul.f32.gmra.mxu0 %v63
    %v82 = vpop.f32.mrf.mxu0
    %v83 = vadd.f32 %v59, %v82
    %84 = vdwg.mxu0
    %vm85 = vcmask 58368
    %86 = vst.msk [vmem:[#allocation2] sm:$0x3] %vm85, %v83
    // Predicated region
    $region22: #{seq_last_selector_forward.1} parent=1 // pred_check
      _
    $region23: #{seq_last_selector_forward.1} parent=1 // pred_check_branch
      %88 = sbr.rel (0) target = $region25
    $region24: #{seq_last_selector_forward.1} parent=1 // pred_region
      %90 = vsyncadd [#allocation3], 0
      %s92 = sshll.u32 [#allocation2], 4
      %s93 = int_to_ptr.vmem [resolvable:$true] %s92
      %s94 = sshll.u32 %s5, 4
      %s95 = int_to_ptr.hbm [resolvable:$true] %s94
      %97 = dma.vmem_to_hbm [thread:$0]  %s93, 32, %s95, [#allocation3]
    $region25: #{seq_last_selector_forward.1} parent=1 // pred_fallthru
      _
    // Predicated region
    $region26: #{seq_last_selector_forward.1} parent=1 // pred_check
      _
    $region27: #{seq_last_selector_forward.1} parent=1 // pred_check_branch
      %99 = sbr.rel (0) target = $region29
    $region28: #{seq_last_selector_forward.1} parent=1 // pred_region
      %101 = dma.done [#allocation3], 32
    $region29: #{seq_last_selector_forward.1} parent=1 // pred_fallthru
      _
    %102 = vsyncpa [#allocation3], 1

</llo_original>
